<compile_context>
chip_gen: v6e
topology: v6e:2x2x1
jax: 0.10.0
libtpu: 0.0.40
codegen_flags: <defaults>
</compile_context>

<pallas_src>
import jax
import jax.numpy as jnp
from jax.experimental import pallas as pl
from jax.experimental.pallas import tpu as pltpu

_LANE = 128        # lane tile width
_SUBLANE = 8       # sublane tile height
_MAX_TB = 1024     # max batch-tile rows for large (training / replay) batches
_SMALL_BATCH = 64  # below this, a plain XLA forward beats pallas_call overhead


def _round_up(n: int, m: int) -> int:
    return ((n + m - 1) // m) * m


def _cdiv(a: int, b: int) -> int:
    return (a + b - 1) // b


# ---------------------------------------------------------------------------
# Kernel: one batch tile. Weights/biases are resident (constant index_map).
# x arrives as unpadded f32 (lane dim = input_size) and is cast to bf16 on the
# VPU inside the kernel; both matmuls accumulate in f32 on the MXU.
# ---------------------------------------------------------------------------
def _qnet_kernel(x_ref, w1_ref, b1_ref, w2_ref, b2_ref, o_ref):
    x = x_ref[...].astype(jnp.bfloat16)                       # (TB, K)
    h = jnp.dot(x, w1_ref[...], preferred_element_type=jnp.float32)
    h = jnp.maximum(h + b1_ref[...], 0.0)                     # bias + ReLU (VPU, f32)
    y = jnp.dot(h.astype(jnp.bfloat16), w2_ref[...],
                preferred_element_type=jnp.float32)
    o_ref[...] = (y + b2_ref[...]).astype(o_ref.dtype)


def prepare_params(w1, b1, w2, b2):
    """One-time parameter prep (at init / after each param update), NOT per
    forward call: pad hidden/output lane dims to multiples of 128 so all
    kernel loads/stores are lane-dense, and cast matmul weights to bf16.

    w1: (input, hidden)   b1: (1, hidden)
    w2: (hidden, output)  b2: (1, output)
    """
    K, H = w1.shape
    N = w2.shape[1]
    H_pad = _round_up(H, _LANE)
    N_pad = _round_up(N, _LANE)
    return {
        # (K, H_pad) bf16 -- zero hidden-padding columns are killed by ReLU(0+0)
        "w1": jnp.pad(w1, ((0, 0), (0, H_pad - H))).astype(jnp.bfloat16),
        "b1": jnp.pad(b1, ((0, 0), (0, H_pad - H))).astype(jnp.float32),
        # (H_pad, N_pad) bf16 -- zero rows for padded hidden lanes contribute 0
        "w2": jnp.pad(w2, ((0, H_pad - H), (0, N_pad - N))).astype(jnp.bfloat16),
        "b2": jnp.pad(b2, ((0, 0), (0, N_pad - N))).astype(jnp.float32),
        "input_size": K,
        "output_size": N,
    }


def linear_qnet_forward(x, params):
    """Fused Linear -> ReLU -> Linear forward pass.

    x      : (B, input_size) float32
    params : dict from prepare_params()
    returns (B, output_size) float32
    """
    w1_p, b1_p, w2_p, b2_p = params["w1"], params["b1"], params["w2"], params["b2"]
    N = params["output_size"]
    B, K = x.shape
    assert K == params["input_size"] == w1_p.shape[0]
    H_pad = w1_p.shape[1]
    N_pad = w2_p.shape[1]

    if B <= _SMALL_BATCH:
        # Single-step / tiny-batch inference: pallas_call fixed overhead plus
        # wrapper pad/slice exceeds the actual compute; let XLA fuse it.
        h = jnp.maximum(
            jnp.dot(x.astype(jnp.bfloat16), w1_p,
                    preferred_element_type=jnp.float32) + b1_p, 0.0)
        y = jnp.dot(h.astype(jnp.bfloat16), w2_p,
                    preferred_element_type=jnp.float32) + b2_p
        return y[:, :N]

    # Batch tiling: big tiles (few grid steps, each step costs ~0.35 us), and
    # always an even grid of >= 2 steps so v7x's two TensorCores both shard
    # the "parallel" batch axis.
    B8 = _round_up(B, _SUBLANE)
    num_tiles = max(2, _cdiv(B8, _MAX_TB))
    if num_tiles % 2:
        num_tiles += 1
    TB = _round_up(_cdiv(B8, num_tiles), _SUBLANE)
    B_pad = TB * num_tiles

    # Only the batch (sublane) dim of x is padded -- f32 at its natural lane
    # width K (no 11->128 inflation, no bf16 pre-cast round trip through HBM).
    x_p = x if B_pad == B else jnp.pad(x, ((0, B_pad - B), (0, 0)))

    out_pad = pl.pallas_call(
        _qnet_kernel,
        out_shape=jax.ShapeDtypeStruct((B_pad, N_pad), jnp.float32),
        grid_spec=pltpu.PrefetchScalarGridSpec(
            num_scalar_prefetch=0,
            grid=(num_tiles,),
            in_specs=[
                pl.BlockSpec((TB, K), lambda i: (i, 0)),        # x   (tiled on B)
                pl.BlockSpec((K, H_pad), lambda i: (0, 0)),     # w1  (resident)
                pl.BlockSpec((1, H_pad), lambda i: (0, 0)),     # b1  (resident)
                pl.BlockSpec((H_pad, N_pad), lambda i: (0, 0)), # w2  (resident)
                pl.BlockSpec((1, N_pad), lambda i: (0, 0)),     # b2  (resident)
            ],
            out_specs=pl.BlockSpec((TB, N_pad), lambda i: (i, 0)),
        ),
        compiler_params=pltpu.CompilerParams(
            dimension_semantics=("parallel",),  # shard batch tiles on v7x 2-TC
        ),
    )(x_p, w1_p, b1_p, w2_p, b2_p)

    # Padded rows/lanes of out_pad hold relu(b1)@W2+b2 garbage; slice them off.
    return out_pad[:B, :N]


def init_params(key, input_size, hidden_size, output_size):
    """Deterministic init mimicking PyTorch nn.Linear default:
    U(-1/sqrt(fan_in), 1/sqrt(fan_in)) for both weights and biases."""
    k1, k2, k3, k4 = jax.random.split(key, 4)
    bound1 = 1.0 / jnp.sqrt(jnp.float32(input_size))
    bound2 = 1.0 / jnp.sqrt(jnp.float32(hidden_size))
    w1 = jax.random.uniform(k1, (input_size, hidden_size), jnp.float32,
                            -bound1, bound1)
    b1 = jax.random.uniform(k2, (1, hidden_size), jnp.float32, -bound1, bound1)
    w2 = jax.random.uniform(k3, (hidden_size, output_size), jnp.float32,
                            -bound2, bound2)
    b2 = jax.random.uniform(k4, (1, output_size), jnp.float32, -bound2, bound2)
    return w1, b1, w2, b2


if __name__ == "__main__":
    # Module-consistent sizes (Q-net style: small state, few actions).
    input_size, hidden_size, output_size = 11, 32, 3

    key = jax.random.PRNGKey(0)
    kx, kp, ks = jax.random.split(key, 3)
    w1, b1, w2, b2 = init_params(kp, input_size, hidden_size, output_size)
    params = prepare_params(w1, b1, w2, b2)   # one-time weight prep

    # --- Pallas path: batched (replay-buffer-sized) forward -----------------
    batch = 256
    x = jax.random.normal(kx, (batch, input_size), jnp.float32)
    out = jax.block_until_ready(linear_qnet_forward(x, params))
    assert out.shape == (batch, output_size)

    # Reference 1: same bf16-input math in plain JAX (tight-ish tolerance,
    # allowing for MXU vs XLA accumulation-order / bf16 rounding-edge diffs).
    xb = x.astype(jnp.bfloat16).astype(jnp.float32)
    w1b = w1.astype(jnp.bfloat16).astype(jnp.float32)
    w2b = w2.astype(jnp.bfloat16).astype(jnp.float32)
    h_ref = jnp.maximum(xb @ w1b + b1, 0.0)
    ref_bf16 = h_ref.astype(jnp.bfloat16).astype(jnp.float32) @ w2b + b2
    assert jnp.allclose(out, ref_bf16, atol=2e-2, rtol=2e-2)

    # Reference 2: full-f32 PyTorch-equivalent forward (loose tolerance
    # accounting for the bf16 matmul inputs).
    ref_f32 = jnp.maximum(x @ w1 + b1, 0.0) @ w2 + b2
    assert jnp.allclose(out, ref_f32, atol=5e-2, rtol=5e-2)

    # --- Small-batch fallback path (single-step inference) ------------------
    x_small = jax.random.normal(ks, (4, input_size), jnp.float32)
    out_small = jax.block_until_ready(linear_qnet_forward(x_small, params))
    ref_small = jnp.maximum(x_small @ w1 + b1, 0.0) @ w2 + b2
    assert out_small.shape == (4, output_size)
    assert jnp.allclose(out_small, ref_small, atol=5e-2, rtol=5e-2)

    # --- Multi-tile grid path (B not a multiple of the tile, grid > 2) ------
    big_B = 2500
    x_big = jax.random.normal(jax.random.PRNGKey(1), (big_B, input_size),
                              jnp.float32)
    out_big = jax.block_until_ready(linear_qnet_forward(x_big, params))
    ref_big = jnp.maximum(x_big @ w1 + b1, 0.0) @ w2 + b2
    assert out_big.shape == (big_B, output_size)
    assert jnp.allclose(out_big, ref_big, atol=5e-2, rtol=5e-2)

    print("KERNEL_OK")
</pallas_src>

<mosaic_0001>
module attributes {stable_mosaic.version = 11 : i64} {
  func.func @_qnet_kernel(%arg0: i32, %arg1: memref<128x11xf32, #tpu.memory_space<vmem>>, %arg2: memref<11x128xbf16, #tpu.memory_space<vmem>>, %arg3: memref<1x128xf32, #tpu.memory_space<vmem>>, %arg4: memref<128x128xbf16, #tpu.memory_space<vmem>>, %arg5: memref<1x128xf32, #tpu.memory_space<vmem>>, %arg6: memref<128x128xf32, #tpu.memory_space<vmem>>) attributes {dimension_semantics = [#tpu.dimension_semantics<parallel>], iteration_bounds = array<i64: 2>, scalar_prefetch = 0 : i64, scratch_operands = 0 : i64, tpu.core_type = #tpu.core_type<tc>, window_params = [{transform_indices = @transform_0, window_bounds = array<i64: 128, 11>}, {pipeline_mode = #tpu.pipeline_mode<synchronous>, transform_indices = @transform_1, window_bounds = array<i64: 11, 128>}, {pipeline_mode = #tpu.pipeline_mode<synchronous>, transform_indices = @transform_2, window_bounds = array<i64: 1, 128>}, {pipeline_mode = #tpu.pipeline_mode<synchronous>, transform_indices = @transform_3, window_bounds = array<i64: 128, 128>}, {pipeline_mode = #tpu.pipeline_mode<synchronous>, transform_indices = @transform_4, window_bounds = array<i64: 1, 128>}, {transform_indices = @transform_5, window_bounds = array<i64: 128, 128>}]} {
    %c0 = arith.constant 0 : index
    %c0_0 = arith.constant 0 : index
    %0 = vector.load %arg1[%c0, %c0_0] : memref<128x11xf32, #tpu.memory_space<vmem>>, vector<128x11xf32>
    %1 = arith.truncf %0 : vector<128x11xf32> to vector<128x11xbf16>
    %c0_1 = arith.constant 0 : index
    %c0_2 = arith.constant 0 : index
    %2 = vector.load %arg2[%c0_1, %c0_2] : memref<11x128xbf16, #tpu.memory_space<vmem>>, vector<11x128xbf16>
    %cst = arith.constant dense<0.000000e+00> : vector<128x128xf32>
    %3 = tpu.matmul %1, %2, %cst {dimension_numbers = #tpu.dot_dimension_numbers<[1], [0], [0], [1], [0, 0, 1, 1], [], []>} : vector<128x11xbf16>, vector<11x128xbf16>, vector<128x128xf32> -> vector<128x128xf32>
    %c0_3 = arith.constant 0 : index
    %c0_4 = arith.constant 0 : index
    %4 = vector.load %arg3[%c0_3, %c0_4] : memref<1x128xf32, #tpu.memory_space<vmem>>, vector<1x128xf32>
    %5 = vector.broadcast %4 : vector<1x128xf32> to vector<128x128xf32>
    %6 = arith.addf %3, %5 : vector<128x128xf32>
    %cst_5 = arith.constant 0.000000e+00 : f32
    %7 = vector.broadcast %cst_5 : f32 to vector<128x128xf32>
    %8 = arith.maximumf %6, %7 : vector<128x128xf32>
    %9 = arith.truncf %8 : vector<128x128xf32> to vector<128x128xbf16>
    %c0_6 = arith.constant 0 : index
    %c0_7 = arith.constant 0 : index
    %10 = vector.load %arg4[%c0_6, %c0_7] : memref<128x128xbf16, #tpu.memory_space<vmem>>, vector<128x128xbf16>
    %cst_8 = arith.constant dense<0.000000e+00> : vector<128x128xf32>
    %11 = tpu.matmul %9, %10, %cst_8 {dimension_numbers = #tpu.dot_dimension_numbers<[1], [0], [0], [1], [0, 0, 1, 1], [], []>} : vector<128x128xbf16>, vector<128x128xbf16>, vector<128x128xf32> -> vector<128x128xf32>
    %c0_9 = arith.constant 0 : index
    %c0_10 = arith.constant 0 : index
    %12 = vector.load %arg5[%c0_9, %c0_10] : memref<1x128xf32, #tpu.memory_space<vmem>>, vector<1x128xf32>
    %13 = vector.broadcast %12 : vector<1x128xf32> to vector<128x128xf32>
    %14 = arith.addf %11, %13 : vector<128x128xf32>
    %c0_11 = arith.constant 0 : index
    %c0_12 = arith.constant 0 : index
    %15 = vector.load %arg6[%c0_11, %c0_12] : memref<128x128xf32, #tpu.memory_space<vmem>>, vector<128x128xf32>
    tpu.vector_store %arg6[%c0_11, %c0_12], %14 {strides = array<i32>} : memref<128x128xf32, #tpu.memory_space<vmem>>, vector<128x128xf32>,
    return
  }
  func.func @transform_0(%arg0: i32) -> (i32, i32) {
    %c0_i32 = arith.constant 0 : i32
    %c0_i32_0 = arith.constant 0 : i32
    return %arg0, %c0_i32 : i32, i32
  }
  func.func @transform_1(%arg0: i32) -> (i32, i32) {
    %c0_i32 = arith.constant 0 : i32
    %c0_i32_0 = arith.constant 0 : i32
    %c0_i32_1 = arith.constant 0 : i32
    return %c0_i32, %c0_i32_0 : i32, i32
  }
  func.func @transform_2(%arg0: i32) -> (i32, i32) {
    %c0_i32 = arith.constant 0 : i32
    %c0_i32_0 = arith.constant 0 : i32
    %c0_i32_1 = arith.constant 0 : i32
    return %c0_i32, %c0_i32_0 : i32, i32
  }
  func.func @transform_3(%arg0: i32) -> (i32, i32) {
    %c0_i32 = arith.constant 0 : i32
    %c0_i32_0 = arith.constant 0 : i32
    %c0_i32_1 = arith.constant 0 : i32
    return %c0_i32, %c0_i32_0 : i32, i32
  }
  func.func @transform_4(%arg0: i32) -> (i32, i32) {
    %c0_i32 = arith.constant 0 : i32
    %c0_i32_0 = arith.constant 0 : i32
    %c0_i32_1 = arith.constant 0 : i32
    return %c0_i32, %c0_i32_0 : i32, i32
  }
  func.func @transform_5(%arg0: i32) -> (i32, i32) {
    %c0_i32 = arith.constant 0 : i32
    %c0_i32_0 = arith.constant 0 : i32
    return %arg0, %c0_i32 : i32, i32
  }
}

</mosaic_0001>

<llo_original>
// kernel: tpu_custom_call.1
$region0: #{tpu_custom_call.1}
  #allocation0 [shape = 'u32[]', space=smem, size = 0x4, offset = 0x4, fixed_abs, tag = 'smem constant byte address 0x4 - core index']
  #allocation1 [shape = 'u32[144,128]{1,0:T(1,128)}', space=vmem, size = 0x12000, scoped, tag = 'internal scratch']
  %s0 = inlined_call_operand.vmem [shape: f32[256,11], index: 0, kind: input, shape index: {}]
  %s1 = inlined_call_operand.vmem [shape: bf16[11,128], index: 1, kind: input, shape index: {}]
  %s2 = inlined_call_operand.vmem [shape: f32[1,128], index: 2, kind: input, shape index: {}]
  %s3 = inlined_call_operand.vmem [shape: bf16[128,128], index: 3, kind: input, shape index: {}]
  %s4 = inlined_call_operand.vmem [shape: f32[1,128], index: 4, kind: input, shape index: {}]
  %s5 = inlined_call_operand.hbm [shape: f32[256,128], index: 5, kind: output, shape index: {}]
  %s6 = sld [smem:[#allocation0]]
  $region53: #{tpu_custom_call.1} parent=0
    _
  %s8 = ssub.s32 1, %s6
  %s9 = scalar_select 0, %s8, %s6
  $region1: #{tpu_custom_call.1} parent=0
    #allocation2 [shape = 'u8[131072]{0}', space=vmem, size = 0x20000, scoped, tag = 'output window, operand 0']
    #allocation3 [shape = 's32[2]{0}', space=sflag, size = 0x8, scoped, tag = 'scoped memory for tpu_custom_call.1']
    %10 = vsyncpa [#allocation3], 0
    %s11 = scalar_lea.sflag [#allocation3], 1
    %12 = vsyncpa %s11, 0
    loop: start=0, step=1, limit=4
    $region2: #{tpu_custom_call.1} parent=1 // loop_pre_header
      _
    $region3: #{tpu_custom_call.1} parent=1 // loop_header
      %s14 = sphi 0, %s18
      %p15 = scmp.ge.s32.totalorder %s14, 4
      %s24 = sphi 0, %s26
      %s27 = sphi 0, %s24
      %s28 = sphi 0, %s27
      %s44 = sphi 0, %s28
      %s48 = sphi 0, %s48
      %s50 = sphi 0, %s48
      %s51 = sphi 0, %s50
      %s65 = sphi 0, %s51
      %s69 = sphi 0, %s69
      %s71 = sphi 0, %s69
      %s72 = sphi 0, %s71
      %s86 = sphi 0, %s72
      %s90 = sphi 0, %s90
      %s92 = sphi 0, %s90
      %s93 = sphi 0, %s92
      %s107 = sphi 0, %s93
      %s111 = sphi 0, %s111
      %s113 = sphi 0, %s111
      %s114 = sphi 0, %s113
      %s128 = sphi 0, %s114
      %s134 = sphi 0, %s136
      %s137 = sphi 0, %s134
      %s138 = sphi 0, %s137
      %s154 = sphi 0, %s138
    $region4: #{tpu_custom_call.1} parent=1 // loop_header_branch
      %17 = sbr.rel (%p15) target = $region8
    $region5: #{tpu_custom_call.1} parent=1 // loop_body
      %s19 = ssub.s32 %s14, 1
      %s20 = ssub.s32 %s14, 2
      %s21 = sadd.s32 %s14, 1
      %s22 = ssub.s32 %s14, %s21
      %p23 = scmp.eq.s32.totalorder %s22, 0
      %s25 = sadd.s32 %s24, 1
      %s26 = scalar_select %p23, %s24, %s25
      %p29 = pneg %p23
      %p30 = scmp.eq.s32.totalorder %s14, 1
      %p31 = por %p29, %p30
      %p32 = scmp.ne.s32.totalorder %s24, %s27
      %p33 = scmp.eq.s32.totalorder %s14, 0
      %p34 = por %p32, %p33
      %p35 = scmp.ne.s32.totalorder %s24, %s27
      %p36 = scmp.eq.s32.totalorder %s19, 1
      %p37 = por %p35, %p36
      %p38 = scmp.ne.s32.totalorder %s27, %s28
      %p39 = scmp.eq.s32.totalorder %s19, 0
      %p40 = por %p38, %p39
      %p41 = scmp.ne.s32.totalorder %s27, %s28
      %p42 = scmp.eq.s32.totalorder %s20, 1
      %p43 = por %p41, %p42
      %p45 = scmp.ne.s32.totalorder %s28, %s44
      %p46 = scmp.eq.s32.totalorder %s20, 0
      %p47 = por %p45, %p46
      %s49 = sadd.s32 %s48, 1
      %p52 = scmp.eq.s32.totalorder %s14, 1
      %p53 = scmp.ne.s32.totalorder %s48, %s50
      %p54 = scmp.eq.s32.totalorder %s14, 0
      %p55 = por %p53, %p54
      %p56 = scmp.ne.s32.totalorder %s48, %s50
      %p57 = scmp.eq.s32.totalorder %s19, 1
      %p58 = por %p56, %p57
      %p59 = scmp.ne.s32.totalorder %s50, %s51
      %p60 = scmp.eq.s32.totalorder %s19, 0
      %p61 = por %p59, %p60
      %p62 = scmp.ne.s32.totalorder %s50, %s51
      %p63 = scmp.eq.s32.totalorder %s20, 1
      %p64 = por %p62, %p63
      %p66 = scmp.ne.s32.totalorder %s51, %s65
      %p67 = scmp.eq.s32.totalorder %s20, 0
      %p68 = por %p66, %p67
      %s70 = sadd.s32 %s69, 1
      %p73 = scmp.eq.s32.totalorder %s14, 1
      %p74 = scmp.ne.s32.totalorder %s69, %s71
      %p75 = scmp.eq.s32.totalorder %s14, 0
      %p76 = por %p74, %p75
      %p77 = scmp.ne.s32.totalorder %s69, %s71
      %p78 = scmp.eq.s32.totalorder %s19, 1
      %p79 = por %p77, %p78
      %p80 = scmp.ne.s32.totalorder %s71, %s72
      %p81 = scmp.eq.s32.totalorder %s19, 0
      %p82 = por %p80, %p81
      %p83 = scmp.ne.s32.totalorder %s71, %s72
      %p84 = scmp.eq.s32.totalorder %s20, 1
      %p85 = por %p83, %p84
      %p87 = scmp.ne.s32.totalorder %s72, %s86
      %p88 = scmp.eq.s32.totalorder %s20, 0
      %p89 = por %p87, %p88
      %s91 = sadd.s32 %s90, 1
      %p94 = scmp.eq.s32.totalorder %s14, 1
      %p95 = scmp.ne.s32.totalorder %s90, %s92
      %p96 = scmp.eq.s32.totalorder %s14, 0
      %p97 = por %p95, %p96
      %p98 = scmp.ne.s32.totalorder %s90, %s92
      %p99 = scmp.eq.s32.totalorder %s19, 1
      %p100 = por %p98, %p99
      %p101 = scmp.ne.s32.totalorder %s92, %s93
      %p102 = scmp.eq.s32.totalorder %s19, 0
      %p103 = por %p101, %p102
      %p104 = scmp.ne.s32.totalorder %s92, %s93
      %p105 = scmp.eq.s32.totalorder %s20, 1
      %p106 = por %p104, %p105
      %p108 = scmp.ne.s32.totalorder %s93, %s107
      %p109 = scmp.eq.s32.totalorder %s20, 0
      %p110 = por %p108, %p109
      %s112 = sadd.s32 %s111, 1
      %p115 = scmp.eq.s32.totalorder %s14, 1
      %p116 = scmp.ne.s32.totalorder %s111, %s113
      %p117 = scmp.eq.s32.totalorder %s14, 0
      %p118 = por %p116, %p117
      %p119 = scmp.ne.s32.totalorder %s111, %s113
      %p120 = scmp.eq.s32.totalorder %s19, 1
      %p121 = por %p119, %p120
      %p122 = scmp.ne.s32.totalorder %s113, %s114
      %p123 = scmp.eq.s32.totalorder %s19, 0
      %p124 = por %p122, %p123
      %p125 = scmp.ne.s32.totalorder %s113, %s114
      %p126 = scmp.eq.s32.totalorder %s20, 1
      %p127 = por %p125, %p126
      %p129 = scmp.ne.s32.totalorder %s114, %s128
      %p130 = scmp.eq.s32.totalorder %s20, 0
      %p131 = por %p129, %p130
      %s132 = ssub.s32 %s14, %s21
      %p133 = scmp.eq.s32.totalorder %s132, 0
      %s135 = sadd.s32 %s134, 1
      %s136 = scalar_select %p133, %s134, %s135
      %p139 = pneg %p133
      %p140 = scmp.eq.s32.totalorder %s14, 1
      %p141 = por %p139, %p140
      %p142 = scmp.ne.s32.totalorder %s134, %s137
      %p143 = scmp.eq.s32.totalorder %s14, 0
      %p144 = por %p142, %p143
      %p145 = scmp.ne.s32.totalorder %s134, %s137
      %p146 = scmp.eq.s32.totalorder %s19, 1
      %p147 = por %p145, %p146
      %p148 = scmp.ne.s32.totalorder %s137, %s138
      %p149 = scmp.eq.s32.totalorder %s19, 0
      %p150 = por %p148, %p149
      %p151 = scmp.ne.s32.totalorder %s137, %s138
      %p152 = scmp.eq.s32.totalorder %s20, 1
      %p153 = por %p151, %p152
      %p155 = scmp.ne.s32.totalorder %s138, %s154
      %p156 = scmp.eq.s32.totalorder %s20, 0
      %p157 = por %p155, %p156
      %p158 = scmp.le.s32.totalorder 1, %s14
      %p159 = scmp.lt.s32.totalorder %s14, 3
      %p160 = pnand %p158, %p159
      %p161 = pneg %p160
      // Predicated region
      $region9: #{tpu_custom_call.1} parent=5 // pred_check
        _
      $region10: #{tpu_custom_call.1} parent=5 // pred_check_branch
        %163 = sbr.rel (%p160) target = $region12
      $region11: #{tpu_custom_call.1} parent=5 // pred_region
        %s164 = ssub.s32 %s14, 1
        // Predicated region
        $region13: #{tpu_custom_call.1} parent=11 // pred_check
          %p165 = pneg %p61
        $region14: #{tpu_custom_call.1} parent=11 // pred_check_branch
          %167 = sbr.rel (%p165) target = $region16
        $region15: #{tpu_custom_call.1} parent=11 // pred_region
          _
        $region16: #{tpu_custom_call.1} parent=11 // pred_fallthru
          _
        // Predicated region
        $region17: #{tpu_custom_call.1} parent=11 // pred_check
          %p168 = pneg %p82
        $region18: #{tpu_custom_call.1} parent=11 // pred_check_branch
          %170 = sbr.rel (%p168) target = $region20
        $region19: #{tpu_custom_call.1} parent=11 // pred_region
          _
        $region20: #{tpu_custom_call.1} parent=11 // pred_fallthru
          _
        // Predicated region
        $region21: #{tpu_custom_call.1} parent=11 // pred_check
          %p171 = pneg %p103
        $region22: #{tpu_custom_call.1} parent=11 // pred_check_branch
          %173 = sbr.rel (%p171) target = $region24
        $region23: #{tpu_custom_call.1} parent=11 // pred_region
          _
        $region24: #{tpu_custom_call.1} parent=11 // pred_fallthru
          _
        // Predicated region
        $region25: #{tpu_custom_call.1} parent=11 // pred_check
          %p174 = pneg %p124
        $region26: #{tpu_custom_call.1} parent=11 // pred_check_branch
          %176 = sbr.rel (%p174) target = $region28
        $region27: #{tpu_custom_call.1} parent=11 // pred_region
          _
        $region28: #{tpu_custom_call.1} parent=11 // pred_fallthru
          _
      $region12: #{tpu_custom_call.1} parent=5 // pred_fallthru
        _
      %p177 = scmp.lt.s32.totalorder %s14, 2
      // Predicated region
      $region29: #{tpu_custom_call.1} parent=5 // pred_check
        %p178 = pneg %p177
      $region30: #{tpu_custom_call.1} parent=5 // pred_check_branch
        %180 = sbr.rel (%p178) target = $region32
      $region31: #{tpu_custom_call.1} parent=5 // pred_region
        // Predicated region
        $region33: #{tpu_custom_call.1} parent=31 // pred_check
          %p181 = pneg %p34
        $region34: #{tpu_custom_call.1} parent=31 // pred_check_branch
          %183 = sbr.rel (%p181) target = $region36
        $region35: #{tpu_custom_call.1} parent=31 // pred_region
          %s184 = smul.u32 16, %s14
          %p185 = scmp.lt.s32.totalorder %s184, 31
          %s186 = scalar_select %p185, %s184, 31
          %s187 = smul.addr %s186, 8
          %s188 = scalar_lea.vmem %s0, %s187
          %s189 = smul.u32 16, %s14
        $region36: #{tpu_custom_call.1} parent=31 // pred_fallthru
          _
      $region32: #{tpu_custom_call.1} parent=5 // pred_fallthru
        _
      %p190 = scmp.le.s32.totalorder 1, %s14
      %p191 = scmp.lt.s32.totalorder %s14, 3
      %p192 = pnand %p190, %p191
      %p193 = pneg %p192
      // Predicated region
      $region37: #{tpu_custom_call.1} parent=5 // pred_check
        _
      $region38: #{tpu_custom_call.1} parent=5 // pred_check_branch
        %195 = sbr.rel (%p192) target = $region40
      $region39: #{tpu_custom_call.1} parent=5 // pred_region
        %s196 = ssub.s32 %s14, 1
        %s197 = smul.u32 16, %s19
        %p198 = scmp.lt.s32.totalorder %s197, 31
        %s199 = scalar_select %p198, %s197, 31
        %s200 = smul.addr %s199, 8
        %s201 = scalar_lea.vmem %s0, %s200
        %p202 = pneg %p40
        %p203 = pneg %p37
        %p204 = pneg %p61
        %p205 = pneg %p58
        %p206 = pneg %p82
        %p207 = pneg %p79
        %p208 = pneg %p103
        %p209 = pneg %p100
        %p210 = pneg %p124
        %p211 = pneg %p121
        %p212 = pneg %p150
        %p213 = pneg %p147
        %s214 = sand.u32 %s137, 1
        %s215 = scalar_lea.sflag [#allocation3], %s214
        %s216 = sand.u32 %s137, 1
        %s217 = smul.addr %s216, 128
        %s218 = scalar_lea.vmem [#allocation2], %s217
        %s219 = smul.u32 16, %s19
        %p220 = scmp.lt.s32.totalorder %s219, 31
        %s221 = scalar_select %p220, %s219, 31
        %s222 = smul.addr %s221, 8
        %s223 = scalar_lea.vmem %s0, %s222
        %s224 = smul.u32 16, %s19
        %s225 = smul.u32 16, %s19
        %v227 = vld [vmem:[%s223] sm:$0xff]
        %v228 = vld [vmem:[%s223 + $0x8] sm:$0xff]
        %v229 = vld [vmem:[%s223 + $0x10] sm:$0xff]
        %v230 = vld [vmem:[%s223 + $0x18] sm:$0xff]
        %v231 = vld [vmem:[%s223 + $0x20] sm:$0xff]
        %v232 = vld [vmem:[%s223 + $0x28] sm:$0xff]
        %v233 = vld [vmem:[%s223 + $0x30] sm:$0xff]
        %v234 = vld [vmem:[%s223 + $0x38] sm:$0xff]
        %v235 = vld [vmem:[%s223 + $0x40] sm:$0xff]
        %v236 = vld [vmem:[%s223 + $0x48] sm:$0xff]
        %v237 = vld [vmem:[%s223 + $0x50] sm:$0xff]
        %v238 = vld [vmem:[%s223 + $0x58] sm:$0xff]
        %v239 = vld [vmem:[%s223 + $0x60] sm:$0xff]
        %v240 = vld [vmem:[%s223 + $0x68] sm:$0xff]
        %v241 = vld [vmem:[%s223 + $0x70] sm:$0xff]
        %v242 = vld [vmem:[%s223 + $0x78] sm:$0xff]
        %v243 = vpack.c.bf16 %v228, %v227
        %v244 = vpack.c.bf16 %v230, %v229
        %v245 = vpack.c.bf16 %v232, %v231
        %v246 = vpack.c.bf16 %v234, %v233
        %v247 = vpack.c.bf16 %v236, %v235
        %v248 = vpack.c.bf16 %v238, %v237
        %v249 = vpack.c.bf16 %v240, %v239
        %v250 = vpack.c.bf16 %v242, %v241
        %v251 = vld [vmem:[%s1] sm:$0xf]
        %v252 = vld [vmem:[%s1 + $0x4] sm:$0x3]
        %v253 = vld [vmem:[%s2] sm:$0x1]
        %v255 = vlaneseq
        %v256 = vshrl.u32 %v255, 7
        %v257 = vsub.s32 0, %v256
        %v258 = vrot.slane %v253, %v257
        %v262 = vunpack.c.l.b16 %v251
        %v263 = vunpack.c.l.b16 %v252
        %v264 = vpack.c.b16 %v263, %v262
        %vm265 = vcmask 89088
        %v267 = vsel %vm265, %v243, 0
        %v270 = vsel %vm265, %v244, 0
        %v273 = vsel %vm265, %v245, 0
        %v276 = vsel %vm265, %v246, 0
        %v279 = vsel %vm265, %v247, 0
        %v282 = vsel %vm265, %v248, 0
        %v285 = vsel %vm265, %v249, 0
        %v288 = vsel %vm265, %v250, 0
        %vm290 = vcmask 1044480
        %vm291 = vcmask 1045504
        %v292 = vsel %vm290, 4294967295, 65535
        %v293 = vsel %vm291, %v292, 0
        %v295 = vand.u32 %v264, %v293
        %297 = vmatprep.subr.bf16.mxu0 0
        %298 = vmatpush1.bf16.msra.mxu0 0
        %299 = vmatprep.subr.bf16.mxu0 0
        %300 = vmatpush1.bf16.msra.mxu0 0
        %301 = vmatprep.subr.bf16.mxu0 0
        %302 = vmatpush1.bf16.msra.mxu0 0
        %303 = vmatprep.subr.bf16.mxu0 0
        %304 = vmatpush1.bf16.msra.mxu0 0
        %305 = vmatprep.subr.bf16.mxu0 0
        %306 = vmatpush1.bf16.msra.mxu0 0
        %307 = vmatprep.subr.bf16.mxu0 0
        %308 = vmatpush1.bf16.msra.mxu0 0
        %309 = vmatprep.subr.bf16.mxu0 0
        %310 = vmatpush1.bf16.msra.mxu0 0
        %311 = vmatprep.subr.bf16.mxu0 0
        %312 = vmatpush1.bf16.msra.mxu0 %v295
        %313 = vmatprep.subr.bf16.mxu0 0
        %314 = vmatpush2.bf16.msra.mxu0 0
        %315 = vmatprep.subr.bf16.mxu0 0
        %316 = vmatpush2.bf16.msra.mxu0 0
        %317 = vmatprep.subr.bf16.mxu0 0
        %318 = vmatpush2.bf16.msra.mxu0 0
        %319 = vmatprep.subr.bf16.mxu0 0
        %320 = vmatpush2.bf16.msra.mxu0 0
        %321 = vmatprep.subr.bf16.mxu0 0
        %322 = vmatpush2.bf16.msra.mxu0 0
        %323 = vmatprep.subr.bf16.mxu0 0
        %324 = vmatpush2.bf16.msra.mxu0 0
        %325 = vmatprep.subr.bf16.mxu0 0
        %326 = vmatpush2.bf16.msra.mxu0 0
        %327 = vmatprep.subr.bf16.mxu0 0
        %328 = vmatpush2.bf16.msra.mxu0 0
        %329 = vmatprep.mubr.bf16.mxu0 0
        %330 = vmatmul.mubr.bf16.gmra.mxu0 %v267
        %v331 = vpop.f32.mrf.mxu0
        %v332 = vadd.f32 %v258, %v331
        %v333 = vpop.f32.mrf.mxu0
        %v334 = vpop.f32.mrf.mxu0
        %v335 = vadd.f32 %v258, %v334
        %v336 = vpop.f32.mrf.mxu0
        %337 = vmatprep.mubr.bf16.mxu0 0
        %338 = vmatmul.mubr.bf16.gmra.mxu0 %v270
        %v339 = vpop.f32.mrf.mxu0
        %v340 = vadd.f32 %v258, %v339
        %v341 = vpop.f32.mrf.mxu0
        %v342 = vpop.f32.mrf.mxu0
        %v343 = vadd.f32 %v258, %v342
        %v344 = vpop.f32.mrf.mxu0
        %345 = vmatprep.mubr.bf16.mxu0 0
        %346 = vmatmul.mubr.bf16.gmra.mxu0 %v273
        %v347 = vpop.f32.mrf.mxu0
        %v348 = vadd.f32 %v258, %v347
        %v349 = vpop.f32.mrf.mxu0
        %v350 = vpop.f32.mrf.mxu0
        %v351 = vadd.f32 %v258, %v350
        %v352 = vpop.f32.mrf.mxu0
        %353 = vmatprep.mubr.bf16.mxu0 0
        %354 = vmatmul.mubr.bf16.gmra.mxu0 %v276
        %v355 = vpop.f32.mrf.mxu0
        %v356 = vadd.f32 %v258, %v355
        %v357 = vpop.f32.mrf.mxu0
        %v358 = vpop.f32.mrf.mxu0
        %v359 = vadd.f32 %v258, %v358
        %v360 = vpop.f32.mrf.mxu0
        %361 = vmatprep.mubr.bf16.mxu0 0
        %362 = vmatmul.mubr.bf16.gmra.mxu0 %v279
        %v363 = vpop.f32.mrf.mxu0
        %v364 = vadd.f32 %v258, %v363
        %v365 = vpop.f32.mrf.mxu0
        %v366 = vpop.f32.mrf.mxu0
        %v367 = vadd.f32 %v258, %v366
        %v368 = vpop.f32.mrf.mxu0
        %369 = vmatprep.mubr.bf16.mxu0 0
        %370 = vmatmul.mubr.bf16.gmra.mxu0 %v282
        %v371 = vpop.f32.mrf.mxu0
        %v372 = vadd.f32 %v258, %v371
        %v373 = vpop.f32.mrf.mxu0
        %v374 = vpop.f32.mrf.mxu0
        %v375 = vadd.f32 %v258, %v374
        %v376 = vpop.f32.mrf.mxu0
        %377 = vmatprep.mubr.bf16.mxu0 0
        %378 = vmatmul.mubr.bf16.gmra.mxu0 %v285
        %v379 = vpop.f32.mrf.mxu0
        %v380 = vadd.f32 %v258, %v379
        %v381 = vpop.f32.mrf.mxu0
        %v382 = vpop.f32.mrf.mxu0
        %v383 = vadd.f32 %v258, %v382
        %v384 = vpop.f32.mrf.mxu0
        %385 = vmatprep.mubr.bf16.mxu0 0
        %386 = vmatmul.mubr.bf16.gmra.mxu0 %v288
        %v387 = vpop.f32.mrf.mxu0
        %v388 = vadd.f32 %v258, %v387
        %v389 = vpop.f32.mrf.mxu0
        %v390 = vpop.f32.mrf.mxu0
        %v391 = vadd.f32 %v258, %v390
        %v392 = vpop.f32.mrf.mxu0
        %393 = vdwg.mxu0
        %v394 = vmax.f32 %v332, 0.0
        %v395 = vmax.f32 %v335, 0.0
        %v396 = vmax.f32 %v340, 0.0
        %v397 = vmax.f32 %v343, 0.0
        %v398 = vmax.f32 %v348, 0.0
        %v399 = vmax.f32 %v351, 0.0
        %v400 = vmax.f32 %v356, 0.0
        %v401 = vmax.f32 %v359, 0.0
        %v402 = vmax.f32 %v364, 0.0
        %v403 = vmax.f32 %v367, 0.0
        %v404 = vmax.f32 %v372, 0.0
        %v405 = vmax.f32 %v375, 0.0
        %v406 = vmax.f32 %v380, 0.0
        %v407 = vmax.f32 %v383, 0.0
        %v408 = vmax.f32 %v388, 0.0
        %v409 = vmax.f32 %v391, 0.0
        %v410 = vpack.c.bf16 %v395, %v394
        %v411 = vpack.c.bf16 %v397, %v396
        %v412 = vpack.c.bf16 %v399, %v398
        %v413 = vpack.c.bf16 %v401, %v400
        %v414 = vpack.c.bf16 %v403, %v402
        %v415 = vpack.c.bf16 %v405, %v404
        %v416 = vpack.c.bf16 %v407, %v406
        %v417 = vpack.c.bf16 %v409, %v408
        %v418 = vld [vmem:[%s3] sm:$0xf]
        %v419 = vld [vmem:[%s3 + $0x4] sm:$0xf]
        %v420 = vld [vmem:[%s3 + $0x8] sm:$0xf]
        %v421 = vld [vmem:[%s3 + $0xc] sm:$0xf]
        %v422 = vld [vmem:[%s3 + $0x10] sm:$0xf]
        %v423 = vld [vmem:[%s3 + $0x14] sm:$0xf]
        %v424 = vld [vmem:[%s3 + $0x18] sm:$0xf]
        %v425 = vld [vmem:[%s3 + $0x1c] sm:$0xf]
        %v426 = vld [vmem:[%s3 + $0x20] sm:$0xf]
        %v427 = vld [vmem:[%s3 + $0x24] sm:$0xf]
        %v428 = vld [vmem:[%s3 + $0x28] sm:$0xf]
        %v429 = vld [vmem:[%s3 + $0x2c] sm:$0xf]
        %v430 = vld [vmem:[%s3 + $0x30] sm:$0xf]
        %v431 = vld [vmem:[%s3 + $0x34] sm:$0xf]
        %v432 = vld [vmem:[%s3 + $0x38] sm:$0xf]
        %v433 = vld [vmem:[%s3 + $0x3c] sm:$0xf]
        %v434 = vld [vmem:[%s4] sm:$0x1]
        %v436 = vlaneseq
        %v437 = vshrl.u32 %v436, 7
        %v438 = vsub.s32 0, %v437
        %v439 = vrot.slane %v434, %v438
        %v457 = vunpack.c.l.b16 %v418
        %v458 = vunpack.c.l.b16 %v419
        %v459 = vunpack.c.l.b16 %v420
        %v460 = vunpack.c.l.b16 %v421
        %v461 = vunpack.c.l.b16 %v422
        %v462 = vunpack.c.l.b16 %v423
        %v463 = vunpack.c.l.b16 %v424
        %v464 = vunpack.c.l.b16 %v425
        %v465 = vunpack.c.l.b16 %v426
        %v466 = vunpack.c.l.b16 %v427
        %v467 = vunpack.c.l.b16 %v428
        %v468 = vunpack.c.l.b16 %v429
        %v469 = vunpack.c.l.b16 %v430
        %v470 = vunpack.c.l.b16 %v431
        %v471 = vunpack.c.l.b16 %v432
        %v472 = vunpack.c.l.b16 %v433
        %v473 = vpack.c.b16 %v458, %v457
        %v474 = vpack.c.b16 %v460, %v459
        %v475 = vpack.c.b16 %v462, %v461
        %v476 = vpack.c.b16 %v464, %v463
        %v477 = vpack.c.b16 %v466, %v465
        %v478 = vpack.c.b16 %v468, %v467
        %v479 = vpack.c.b16 %v470, %v469
        %v480 = vpack.c.b16 %v472, %v471
        %489 = vmatprep.subr.bf16.mxu0 0
        %490 = vmatpush1.bf16.msra.mxu0 %v480
        %491 = vmatprep.subr.bf16.mxu0 0
        %492 = vmatpush1.bf16.msra.mxu0 %v479
        %493 = vmatprep.subr.bf16.mxu0 0
        %494 = vmatpush1.bf16.msra.mxu0 %v478
        %495 = vmatprep.subr.bf16.mxu0 0
        %496 = vmatpush1.bf16.msra.mxu0 %v477
        %497 = vmatprep.subr.bf16.mxu0 0
        %498 = vmatpush1.bf16.msra.mxu0 %v476
        %499 = vmatprep.subr.bf16.mxu0 0
        %500 = vmatpush1.bf16.msra.mxu0 %v475
        %501 = vmatprep.subr.bf16.mxu0 0
        %502 = vmatpush1.bf16.msra.mxu0 %v474
        %503 = vmatprep.subr.bf16.mxu0 0
        %504 = vmatpush1.bf16.msra.mxu0 %v473
        %505 = vmatprep.subr.bf16.mxu0 0
        %506 = vmatpush2.bf16.msra.mxu0 0
        %507 = vmatprep.subr.bf16.mxu0 0
        %508 = vmatpush2.bf16.msra.mxu0 0
        %509 = vmatprep.subr.bf16.mxu0 0
        %510 = vmatpush2.bf16.msra.mxu0 0
        %511 = vmatprep.subr.bf16.mxu0 0
        %512 = vmatpush2.bf16.msra.mxu0 0
        %513 = vmatprep.subr.bf16.mxu0 0
        %514 = vmatpush2.bf16.msra.mxu0 0
        %515 = vmatprep.subr.bf16.mxu0 0
        %516 = vmatpush2.bf16.msra.mxu0 0
        %517 = vmatprep.subr.bf16.mxu0 0
        %518 = vmatpush2.bf16.msra.mxu0 0
        %519 = vmatprep.subr.bf16.mxu0 0
        %520 = vmatpush2.bf16.msra.mxu0 0
        %521 = vmatprep.mubr.bf16.mxu0 0
        %522 = vmatmul.mubr.bf16.gmra.mxu0 %v410
        %v523 = vpop.f32.mrf.mxu0
        %v524 = vadd.f32 %v439, %v523
        %v525 = vpop.f32.mrf.mxu0
        %v526 = vpop.f32.mrf.mxu0
        %v527 = vadd.f32 %v439, %v526
        %v528 = vpop.f32.mrf.mxu0
        %529 = vmatprep.mubr.bf16.mxu0 0
        %530 = vmatmul.mubr.bf16.gmra.mxu0 %v411
        %v531 = vpop.f32.mrf.mxu0
        %v532 = vadd.f32 %v439, %v531
        %v533 = vpop.f32.mrf.mxu0
        %v534 = vpop.f32.mrf.mxu0
        %v535 = vadd.f32 %v439, %v534
        %v536 = vpop.f32.mrf.mxu0
        %537 = vmatprep.mubr.bf16.mxu0 0
        %538 = vmatmul.mubr.bf16.gmra.mxu0 %v412
        %v539 = vpop.f32.mrf.mxu0
        %v540 = vadd.f32 %v439, %v539
        %v541 = vpop.f32.mrf.mxu0
        %v542 = vpop.f32.mrf.mxu0
        %v543 = vadd.f32 %v439, %v542
        %v544 = vpop.f32.mrf.mxu0
        %545 = vmatprep.mubr.bf16.mxu0 0
        %546 = vmatmul.mubr.bf16.gmra.mxu0 %v413
        %v547 = vpop.f32.mrf.mxu0
        %v548 = vadd.f32 %v439, %v547
        %v549 = vpop.f32.mrf.mxu0
        %v550 = vpop.f32.mrf.mxu0
        %v551 = vadd.f32 %v439, %v550
        %v552 = vpop.f32.mrf.mxu0
        %553 = vmatprep.mubr.bf16.mxu0 0
        %554 = vmatmul.mubr.bf16.gmra.mxu0 %v414
        %v555 = vpop.f32.mrf.mxu0
        %v556 = vadd.f32 %v439, %v555
        %v557 = vpop.f32.mrf.mxu0
        %v558 = vpop.f32.mrf.mxu0
        %v559 = vadd.f32 %v439, %v558
        %v560 = vpop.f32.mrf.mxu0
        %561 = vmatprep.mubr.bf16.mxu0 0
        %562 = vmatmul.mubr.bf16.gmra.mxu0 %v415
        %v563 = vpop.f32.mrf.mxu0
        %v564 = vadd.f32 %v439, %v563
        %v565 = vpop.f32.mrf.mxu0
        %v566 = vpop.f32.mrf.mxu0
        %v567 = vadd.f32 %v439, %v566
        %v568 = vpop.f32.mrf.mxu0
        %569 = vmatprep.mubr.bf16.mxu0 0
        %570 = vmatmul.mubr.bf16.gmra.mxu0 %v416
        %v571 = vpop.f32.mrf.mxu0
        %v572 = vadd.f32 %v439, %v571
        %v573 = vpop.f32.mrf.mxu0
        %v574 = vpop.f32.mrf.mxu0
        %v575 = vadd.f32 %v439, %v574
        %v576 = vpop.f32.mrf.mxu0
        %577 = vmatprep.mubr.bf16.mxu0 0
        %578 = vmatmul.mubr.bf16.gmra.mxu0 %v417
        %v579 = vpop.f32.mrf.mxu0
        %v580 = vadd.f32 %v439, %v579
        %v581 = vpop.f32.mrf.mxu0
        %v582 = vpop.f32.mrf.mxu0
        %v583 = vadd.f32 %v439, %v582
        %v584 = vpop.f32.mrf.mxu0
        %585 = vdwg.mxu0
        %586 = vst [vmem:[%s218] sm:$0xff] %v524
        %587 = vst [vmem:[%s218 + $0x8] sm:$0xff] %v527
        %588 = vst [vmem:[%s218 + $0x10] sm:$0xff] %v532
        %589 = vst [vmem:[%s218 + $0x18] sm:$0xff] %v535
        %590 = vst [vmem:[%s218 + $0x20] sm:$0xff] %v540
        %591 = vst [vmem:[%s218 + $0x28] sm:$0xff] %v543
        %592 = vst [vmem:[%s218 + $0x30] sm:$0xff] %v548
        %593 = vst [vmem:[%s218 + $0x38] sm:$0xff] %v551
        %594 = vst [vmem:[%s218 + $0x40] sm:$0xff] %v556
        %595 = vst [vmem:[%s218 + $0x48] sm:$0xff] %v559
        %596 = vst [vmem:[%s218 + $0x50] sm:$0xff] %v564
        %597 = vst [vmem:[%s218 + $0x58] sm:$0xff] %v567
        %598 = vst [vmem:[%s218 + $0x60] sm:$0xff] %v572
        %599 = vst [vmem:[%s218 + $0x68] sm:$0xff] %v575
        %600 = vst [vmem:[%s218 + $0x70] sm:$0xff] %v580
        %601 = vst [vmem:[%s218 + $0x78] sm:$0xff] %v583
        %s602 = sand.u32 %s137, 1
        %s603 = scalar_lea.sflag [#allocation3], %s602
        %s604 = sand.u32 %s137, 1
        %s605 = smul.addr %s604, 128
        %s606 = scalar_lea.vmem [#allocation2], %s605
        // Predicated region
        $region41: #{tpu_custom_call.1} parent=39 // pred_check
          %p607 = pneg %p147
        $region42: #{tpu_custom_call.1} parent=39 // pred_check_branch
          %609 = sbr.rel (%p607) target = $region44
        $region43: #{tpu_custom_call.1} parent=39 // pred_region
          %s610 = smul.u32 16, %s19
          %s612 = ssub.s32 2048, 2048
          %613 = vsyncadd %s603, %s612
          %s614 = smul.addr %s610, 128
          %s615 = scalar_lea.hbm %s5, %s614
          %s616 = sshll.u32 %s606, 4
          %s617 = int_to_ptr.vmem [resolvable:$true] %s616
          %622 = dma.vmem_to_hbm [thread:$0]  %s617, 2048, %s615, %s603, 128, 128, 8
        $region44: #{tpu_custom_call.1} parent=39 // pred_fallthru
          _
      $region40: #{tpu_custom_call.1} parent=5 // pred_fallthru
        _
      %p623 = scmp.le.s32.totalorder 2, %s14
      // Predicated region
      $region45: #{tpu_custom_call.1} parent=5 // pred_check
        %p624 = pneg %p623
      $region46: #{tpu_custom_call.1} parent=5 // pred_check_branch
        %626 = sbr.rel (%p624) target = $region48
      $region47: #{tpu_custom_call.1} parent=5 // pred_region
        %s627 = ssub.s32 %s14, 2
        // Predicated region
        $region49: #{tpu_custom_call.1} parent=47 // pred_check
          %p628 = pneg %p153
        $region50: #{tpu_custom_call.1} parent=47 // pred_check_branch
          %630 = sbr.rel (%p628) target = $region52
        $region51: #{tpu_custom_call.1} parent=47 // pred_region
          %s631 = sand.u32 %s138, 1
          %s632 = scalar_lea.sflag [#allocation3], %s631
          %s633 = sand.u32 %s138, 1
          %s634 = smul.addr %s633, 128
          %s635 = scalar_lea.vmem [#allocation2], %s634
          %636 = dma.done %s632, 2048
        $region52: #{tpu_custom_call.1} parent=47 // pred_fallthru
          _
      $region48: #{tpu_custom_call.1} parent=5 // pred_fallthru
        _
    $region6: #{tpu_custom_call.1} parent=1 // loop_footer
      %s18 = sadd.s32 1, %s14
    $region7: #{tpu_custom_call.1} parent=1 // loop_footer_branch
      %13 = sbr.rel target = $region3
    $region8: #{tpu_custom_call.1} parent=1 // loop_exit
      _
    %637 = vsyncpa [#allocation3], 1
    %s638 = scalar_lea.sflag [#allocation3], 1
    %639 = vsyncpa %s638, 1

</llo_original>
